<compile_context>
chip_gen: v7x
topology: tpu7x:2x2x1
jax: 0.10.0
libtpu: 0.0.40
codegen_flags: <defaults>
</compile_context>

<pallas_src>
import math
import functools

import jax
import jax.numpy as jnp
from jax.experimental import pallas as pl
from jax.experimental.pallas import tpu as pltpu


# ---------------------------------------------------------------------------
# helpers
# ---------------------------------------------------------------------------
def _round_up(x, m):
    return (x + m - 1) // m * m


def _lane_tile(n, target):
    """Tile for a lane (last) dim: full dim if small, else largest 128-multiple divisor."""
    if n <= target:
        return n
    t = (target // 128) * 128
    while t >= 128:
        if n % t == 0:
            return t
        t -= 128
    return n  # fallback: whole dim (always legal, just bigger VMEM block)


def _seq_tile(size, target):
    """Sequence tile (sublane dim): 8-aligned, padded instead of full-size fallback."""
    tile = min(_round_up(size, 8), _round_up(target, 8))
    padded = _round_up(size, tile)
    return tile, padded


def _pick_head_group(n_heads, hd, lane_target=256):
    """Heads per grid step so the per-step working set is ~256 lanes wide."""
    g = max(1, min(n_heads, lane_target // max(hd, 1)))
    while n_heads % g:
        g -= 1
    return max(g, 1)


def _vmem_budget():
    """Per-generation VMEM budget with headroom (v7x: 64 MiB phys -> ~48 MiB)."""
    try:
        cap = int(pltpu.get_tpu_info().vmem_capacity_bytes)
    except Exception:
        cap = 64 << 20  # safe on every generation
    return max(32 << 20, (cap * 3) // 4)


# ---------------------------------------------------------------------------
# generic tiled matmul + bias kernel (used for Q, fused K/V, output projection)
# ---------------------------------------------------------------------------
def _matmul_bias_kernel(a_ref, b_ref, bias_ref, o_ref, acc_ref):
    @pl.when(pl.program_id(2) == 0)
    def _zero():
        acc_ref[...] = jnp.zeros_like(acc_ref)

    acc_ref[...] += jnp.dot(a_ref[...], b_ref[...],
                            preferred_element_type=jnp.float32)

    @pl.when(pl.program_id(2) == pl.num_programs(2) - 1)
    def _store():
        o_ref[...] = (acc_ref[...] + bias_ref[...]).astype(o_ref.dtype)


def _matmul_bias(a, w, b, *, out_dtype, budget, tm=256, tn=512, tk=512):
    """a: (M, K) bf16, w: (K, N) bf16, b: (1, N) f32 -> (M, N) out_dtype."""
    M, K = a.shape
    _, N = w.shape

    tm = min(_round_up(tm, 8), _round_up(M, 8))
    m_pad = _round_up(M, tm)
    if m_pad != M:
        a = jnp.pad(a, ((0, m_pad - M), (0, 0)))
    tn = _lane_tile(N, tn)
    tk = _lane_tile(K, tk)
    grid = (m_pad // tm, N // tn, K // tk)

    o_bytes = jnp.dtype(out_dtype).itemsize
    vmem_est = (2 * (tm * tk + tk * tn) * a.dtype.itemsize   # double-buffered inputs
                + 2 * tm * tn * o_bytes                      # output block
                + tm * tn * 4 + 2 * tn * 4)                  # f32 acc + bias
    vmem_limit = int(min(max(2 * vmem_est, 32 << 20), budget))

    out = pl.pallas_call(
        _matmul_bias_kernel,
        out_shape=jax.ShapeDtypeStruct((m_pad, N), out_dtype),
        grid_spec=pltpu.PrefetchScalarGridSpec(
            num_scalar_prefetch=0,
            grid=grid,
            in_specs=[
                pl.BlockSpec((tm, tk), lambda i, j, k: (i, k)),
                pl.BlockSpec((tk, tn), lambda i, j, k: (k, j)),
                pl.BlockSpec((1, tn), lambda i, j, k: (0, j)),
            ],
            out_specs=pl.BlockSpec((tm, tn), lambda i, j, k: (i, j)),
            scratch_shapes=[pltpu.VMEM((tm, tn), jnp.float32)]),
        compiler_params=pltpu.CompilerParams(
            dimension_semantics=("parallel", "parallel", "arbitrary"),
            vmem_limit_bytes=vmem_limit),
        cost_estimate=pl.CostEstimate(
            flops=int(2 * m_pad * N * K),
            transcendentals=0,
            bytes_accessed=int(m_pad * K * a.dtype.itemsize
                               + (m_pad // tm) * K * N * w.dtype.itemsize
                               + m_pad * N * o_bytes + N * 4)),
    )(a, w, b)
    return out[:M] if m_pad != M else out


# ---------------------------------------------------------------------------
# flash attention over precomputed per-head Q/K/V (B, H, S, hd)
# ---------------------------------------------------------------------------
def _flash_kernel(q_ref, k_ref, v_ref, o_ref, m_sc, l_sc, acc_sc, *,
                  kv_len, tk, masked):
    ki = pl.program_id(3)

    @pl.when(ki == 0)
    def _init():
        m_sc[...] = jnp.full_like(m_sc, -jnp.inf)
        l_sc[...] = jnp.zeros_like(l_sc)
        acc_sc[...] = jnp.zeros_like(acc_sc)

    q = q_ref[0]                                      # (G, tq, hd) bf16 (pre-scaled)
    k = k_ref[0]                                      # (G, tk, hd) bf16
    v = v_ref[0]                                      # (G, tk, hd) bf16

    s = jnp.einsum('gqd,gkd->gqk', q, k,
                   preferred_element_type=jnp.float32)  # (G, tq, tk) f32
    if masked:  # only emitted when Sk was padded (static python bool)
        pos = ki * tk + jax.lax.broadcasted_iota(jnp.int32, s.shape, 2)
        s = jnp.where(pos < kv_len, s, -1e30)

    m_prev = m_sc[...]
    m_new = jnp.maximum(m_prev, jnp.max(s, axis=-1, keepdims=True))
    alpha = jnp.exp(m_prev - m_new)
    p = jnp.exp(s - m_new)
    l_sc[...] = alpha * l_sc[...] + jnp.sum(p, axis=-1, keepdims=True)
    acc_sc[...] = alpha * acc_sc[...] + jnp.einsum(
        'gqk,gkd->gqd', p.astype(jnp.bfloat16), v,
        preferred_element_type=jnp.float32)
    m_sc[...] = m_new

    @pl.when(ki == pl.num_programs(3) - 1)
    def _finish():
        inv_l = pl.reciprocal(l_sc[...], approx=True)
        o_ref[0] = (acc_sc[...] * inv_l).astype(o_ref.dtype)


def _flash_attention(q, k, v, *, kv_len, tq, tk, group, budget):
    B, H, sq_pad, hd = q.shape
    sk_pad = k.shape[2]
    ng, nq, nk = H // group, sq_pad // tq, sk_pad // tk
    masked = sk_pad != kv_len

    kernel = functools.partial(_flash_kernel, kv_len=kv_len, tk=tk, masked=masked)

    blk_q = tq * group * hd * 2
    blk_kv = tk * group * hd * 2
    vmem_est = (2 * (blk_q + 2 * blk_kv + blk_q)          # double-buffered q/k/v/out
                + group * tq * (hd * 4 + 8)               # f32 acc + m + l scratch
                + 4 * group * tq * tk * 4)                # score working set
    vmem_limit = int(min(max(2 * vmem_est, 32 << 20), budget))

    return pl.pallas_call(
        kernel,
        out_shape=jax.ShapeDtypeStruct((B, H, sq_pad, hd), jnp.bfloat16),
        grid_spec=pltpu.PrefetchScalarGridSpec(
            num_scalar_prefetch=0,
            grid=(B, ng, nq, nk),
            in_specs=[
                pl.BlockSpec((1, group, tq, hd), lambda b, g, qi, ki: (b, g, qi, 0)),
                pl.BlockSpec((1, group, tk, hd), lambda b, g, qi, ki: (b, g, ki, 0)),
                pl.BlockSpec((1, group, tk, hd), lambda b, g, qi, ki: (b, g, ki, 0)),
            ],
            out_specs=pl.BlockSpec((1, group, tq, hd),
                                   lambda b, g, qi, ki: (b, g, qi, 0)),
            scratch_shapes=[
                pltpu.VMEM((group, tq, 1), jnp.float32),   # running row max
                pltpu.VMEM((group, tq, 1), jnp.float32),   # running row sum
                pltpu.VMEM((group, tq, hd), jnp.float32),  # attention accumulator
            ]),
        compiler_params=pltpu.CompilerParams(
            dimension_semantics=("parallel", "parallel", "parallel", "arbitrary"),
            vmem_limit_bytes=vmem_limit),
        cost_estimate=pl.CostEstimate(
            flops=int(4 * B * H * sq_pad * sk_pad * hd),
            transcendentals=int(B * H * sq_pad * sk_pad),
            bytes_accessed=int(2 * B * H * (2 * sq_pad * hd + 2 * nq * sk_pad * hd))),
    )(q, k, v)


# ---------------------------------------------------------------------------
# host-side one-time parameter prep + top-level forward
# ---------------------------------------------------------------------------
def prepare_params(params, n_heads):
    """One-time weight prep (do NOT call per forward): fold 1/sqrt(hd) into Wq/bq,
    fuse Wk/Wv into one (D, 2D) matrix, cast weights to bf16, keep biases f32."""
    wq, bq, wk, bk, wv, bv, wo, bo = params
    D = wq.shape[0]
    hd = D // n_heads
    scale = 1.0 / math.sqrt(hd)
    wq_s = (wq * scale).astype(jnp.bfloat16)
    bq_s = (bq * scale).astype(jnp.float32).reshape(1, D)
    wkv = jnp.concatenate([wk, wv], axis=1).astype(jnp.bfloat16)       # (D, 2D)
    bkv = jnp.concatenate([bk, bv], axis=1).astype(jnp.float32).reshape(1, 2 * D)
    wo_b = wo.astype(jnp.bfloat16)
    bo_f = bo.astype(jnp.float32).reshape(1, D)
    return (wq_s, bq_s, wkv, bkv, wo_b, bo_f)


def cross_mha_pallas(x, enc, prepared, *, n_heads, out_dtype=None,
                     tq=256, tk=512):
    """x: (B, Sq, D), enc: (B, Sk, D) -> (B, Sq, D)."""
    wq_s, bq_s, wkv, bkv, wo_b, bo_f = prepared
    B, Sq, D = x.shape
    Be, Sk, De = enc.shape
    assert Be == B and De == D
    hd = D // n_heads
    assert hd * n_heads == D, "dim_model must be divisible by n_heads"
    out_dtype = out_dtype if out_dtype is not None else x.dtype
    budget = _vmem_budget()

    x2 = x.reshape(B * Sq, D).astype(jnp.bfloat16)
    e2 = enc.reshape(B * Sk, D).astype(jnp.bfloat16)

    # Hoisted projections: full-D-contraction GEMMs, computed exactly once.
    q2 = _matmul_bias(x2, wq_s, bq_s, out_dtype=jnp.bfloat16, budget=budget)
    kv2 = _matmul_bias(e2, wkv, bkv, out_dtype=jnp.bfloat16, budget=budget)
    k2, v2 = kv2[:, :D], kv2[:, D:]

    def to_heads(t, S):
        return t.reshape(B, S, n_heads, hd).transpose(0, 2, 1, 3)   # (B, H, S, hd)

    qh, kh, vh = to_heads(q2, Sq), to_heads(k2, Sk), to_heads(v2, Sk)

    group = _pick_head_group(n_heads, hd)
    tq_, sq_pad = _seq_tile(Sq, tq)
    tk_, sk_pad = _seq_tile(Sk, tk)
    if sq_pad != Sq:
        qh = jnp.pad(qh, ((0, 0), (0, 0), (0, sq_pad - Sq), (0, 0)))
    if sk_pad != Sk:
        kh = jnp.pad(kh, ((0, 0), (0, 0), (0, sk_pad - Sk), (0, 0)))
        vh = jnp.pad(vh, ((0, 0), (0, 0), (0, sk_pad - Sk), (0, 0)))

    attn = _flash_attention(qh, kh, vh, kv_len=Sk, tq=tq_, tk=tk_,
                            group=group, budget=budget)
    attn = attn[:, :, :Sq, :].transpose(0, 2, 1, 3).reshape(B * Sq, D)

    # Output projection as one (B*Sq, D) @ (D, D) GEMM (full-D contraction).
    out = _matmul_bias(attn, wo_b, bo_f, out_dtype=out_dtype, budget=budget)
    # TODO(synk): torch.nn.Dropout(0.1) omitted (inference/eval semantics).
    return out.reshape(B, Sq, D)


# ---------------------------------------------------------------------------
# synthetic params + pure-JAX reference (mirrors the kernel's bf16 conventions)
# ---------------------------------------------------------------------------
def _init_params(key, dim_model, n_heads):
    head_dim = dim_model // n_heads
    assert head_dim * n_heads == dim_model
    keys = jax.random.split(key, 8)

    def lin(kw, kb, n_in, n_out):
        bound = 1.0 / math.sqrt(n_in)
        w = jax.random.uniform(kw, (n_in, n_out), jnp.float32, -bound, bound)
        b = jax.random.uniform(kb, (1, n_out), jnp.float32, -bound, bound)
        return w, b

    wq, bq = lin(keys[0], keys[1], dim_model, dim_model)
    wk, bk = lin(keys[2], keys[3], dim_model, dim_model)
    wv, bv = lin(keys[4], keys[5], dim_model, dim_model)
    wo, bo = lin(keys[6], keys[7], dim_model, dim_model)
    return (wq, bq, wk, bk, wv, bv, wo, bo)


def _reference(x, enc, params, *, n_heads):
    wq, bq, wk, bk, wv, bv, wo, bo = params
    B, Sq, D = x.shape
    Sk = enc.shape[1]
    hd = D // n_heads
    scale = 1.0 / math.sqrt(hd)
    bf = jnp.bfloat16

    def proj(a, w, b):
        r = jnp.einsum('bsd,de->bse', a.astype(bf), w.astype(bf),
                       preferred_element_type=jnp.float32) + b[0]
        return r.astype(bf)

    q = proj(x, wq * scale, bq * scale)
    k = proj(enc, wk, bk)
    v = proj(enc, wv, bv)
    qh = q.reshape(B, Sq, n_heads, hd).transpose(0, 2, 1, 3)
    kh = k.reshape(B, Sk, n_heads, hd).transpose(0, 2, 1, 3)
    vh = v.reshape(B, Sk, n_heads, hd).transpose(0, 2, 1, 3)
    s = jnp.einsum('bhqd,bhkd->bhqk', qh, kh, preferred_element_type=jnp.float32)
    p = jax.nn.softmax(s, axis=-1)
    attn = jnp.einsum('bhqk,bhkd->bhqd', p.astype(bf), vh,
                      preferred_element_type=jnp.float32).astype(bf)
    attn = attn.transpose(0, 2, 1, 3).reshape(B, Sq, D)
    out = jnp.einsum('bsd,de->bse', attn, wo.astype(bf),
                     preferred_element_type=jnp.float32) + bo[0]
    return out


if __name__ == "__main__":
    B, Sq, Sk = 2, 8, 16
    dim_model, n_heads = 32, 4

    key = jax.random.PRNGKey(0)
    k_x, k_enc, k_params = jax.random.split(key, 3)
    x = jax.random.normal(k_x, (B, Sq, dim_model), jnp.float32)
    enc = jax.random.normal(k_enc, (B, Sk, dim_model), jnp.float32)
    params = _init_params(k_params, dim_model, n_heads)

    prepared = prepare_params(params, n_heads)   # one-time host-side weight prep
    out = cross_mha_pallas(x, enc, prepared, n_heads=n_heads)
    out = jax.block_until_ready(out)

    ref = _reference(x, enc, params, n_heads=n_heads)
    assert out.shape == (B, Sq, dim_model)
    assert jnp.allclose(out, ref, atol=2e-2, rtol=2e-2), "mismatch vs reference"
    print("KERNEL_OK")
</pallas_src>

<mosaic_0001>
module attributes {stable_mosaic.version = 11 : i64} {
  func.func @_matmul_bias_kernel(%arg0: i32, %arg1: i32, %arg2: i32, %arg3: memref<16x32xbf16, #tpu.memory_space<vmem>>, %arg4: memref<32x32xbf16, #tpu.memory_space<vmem>>, %arg5: memref<1x32xf32, #tpu.memory_space<vmem>>, %arg6: memref<16x32xbf16, #tpu.memory_space<vmem>>, %arg7: memref<16x32xf32, #tpu.memory_space<vmem>>) attributes {dimension_semantics = [#tpu.dimension_semantics<parallel>, #tpu.dimension_semantics<parallel>, #tpu.dimension_semantics<arbitrary>], iteration_bounds = array<i64: 1, 1, 1>, scalar_prefetch = 0 : i64, scratch_operands = 1 : i64, tpu.core_type = #tpu.core_type<tc>, window_params = [{transform_indices = @transform_0, window_bounds = array<i64: 16, 32>}, {transform_indices = @transform_1, window_bounds = array<i64: 32, 32>}, {transform_indices = @transform_2, window_bounds = array<i64: 1, 32>}, {transform_indices = @transform_3, window_bounds = array<i64: 16, 32>}]} {
    %c0_i32 = arith.constant 0 : i32
    %0 = arith.cmpi eq, %arg2, %c0_i32 : i32
    %1 = arith.extui %0 : i1 to i32
    %c0_i32_0 = arith.constant 0 : i32
    %2 = arith.cmpi ne, %1, %c0_i32_0 : i32
    scf.if %2 {
      %cst_10 = arith.constant 0.000000e+00 : f32
      %12 = vector.broadcast %cst_10 : f32 to vector<16x32xf32>
      %c0_11 = arith.constant 0 : index
      %c0_12 = arith.constant 0 : index
      %13 = vector.load %arg7[%c0_11, %c0_12] : memref<16x32xf32, #tpu.memory_space<vmem>>, vector<16x32xf32>
      tpu.vector_store %arg7[%c0_11, %c0_12], %12 {strides = array<i32>} : memref<16x32xf32, #tpu.memory_space<vmem>>, vector<16x32xf32>,
    } else {
    }
    %c0 = arith.constant 0 : index
    %c0_1 = arith.constant 0 : index
    %3 = vector.load %arg7[%c0, %c0_1] : memref<16x32xf32, #tpu.memory_space<vmem>>, vector<16x32xf32>
    %c0_2 = arith.constant 0 : index
    %c0_3 = arith.constant 0 : index
    %4 = vector.load %arg3[%c0_2, %c0_3] : memref<16x32xbf16, #tpu.memory_space<vmem>>, vector<16x32xbf16>
    %c0_4 = arith.constant 0 : index
    %c0_5 = arith.constant 0 : index
    %5 = vector.load %arg4[%c0_4, %c0_5] : memref<32x32xbf16, #tpu.memory_space<vmem>>, vector<32x32xbf16>
    %cst = arith.constant dense<0.000000e+00> : vector<16x32xf32>
    %6 = tpu.matmul %4, %5, %cst {dimension_numbers = #tpu.dot_dimension_numbers<[1], [0], [0], [1], [0, 0, 1, 1], [], []>} : vector<16x32xbf16>, vector<32x32xbf16>, vector<16x32xf32> -> vector<16x32xf32>
    %7 = arith.addf %3, %6 : vector<16x32xf32>
    %c0_6 = arith.constant 0 : index
    %c0_7 = arith.constant 0 : index
    %8 = vector.load %arg7[%c0_6, %c0_7] : memref<16x32xf32, #tpu.memory_space<vmem>>, vector<16x32xf32>
    tpu.vector_store %arg7[%c0_6, %c0_7], %7 {strides = array<i32>} : memref<16x32xf32, #tpu.memory_space<vmem>>, vector<16x32xf32>,
    %c0_i32_8 = arith.constant 0 : i32
    %9 = arith.cmpi eq, %arg2, %c0_i32_8 : i32
    %10 = arith.extui %9 : i1 to i32
    %c0_i32_9 = arith.constant 0 : i32
    %11 = arith.cmpi ne, %10, %c0_i32_9 : i32
    scf.if %11 {
      %c0_10 = arith.constant 0 : index
      %c0_11 = arith.constant 0 : index
      %12 = vector.load %arg7[%c0_10, %c0_11] : memref<16x32xf32, #tpu.memory_space<vmem>>, vector<16x32xf32>
      %c0_12 = arith.constant 0 : index
      %c0_13 = arith.constant 0 : index
      %13 = vector.load %arg5[%c0_12, %c0_13] : memref<1x32xf32, #tpu.memory_space<vmem>>, vector<1x32xf32>
      %14 = vector.broadcast %13 : vector<1x32xf32> to vector<16x32xf32>
      %15 = arith.addf %12, %14 : vector<16x32xf32>
      %16 = arith.truncf %15 : vector<16x32xf32> to vector<16x32xbf16>
      %c0_14 = arith.constant 0 : index
      %c0_15 = arith.constant 0 : index
      %17 = vector.load %arg6[%c0_14, %c0_15] : memref<16x32xbf16, #tpu.memory_space<vmem>>, vector<16x32xbf16>
      tpu.vector_store %arg6[%c0_14, %c0_15], %16 {strides = array<i32>} : memref<16x32xbf16, #tpu.memory_space<vmem>>, vector<16x32xbf16>,
    } else {
    }
    return
  }
  func.func @transform_0(%arg0: i32, %arg1: i32, %arg2: i32) -> (i32, i32) {
    %c0_i32 = arith.constant 0 : i32
    return %arg0, %arg2 : i32, i32
  }
  func.func @transform_1(%arg0: i32, %arg1: i32, %arg2: i32) -> (i32, i32) {
    %c0_i32 = arith.constant 0 : i32
    return %arg2, %arg1 : i32, i32
  }
  func.func @transform_2(%arg0: i32, %arg1: i32, %arg2: i32) -> (i32, i32) {
    %c0_i32 = arith.constant 0 : i32
    %c0_i32_0 = arith.constant 0 : i32
    return %c0_i32, %arg1 : i32, i32
  }
  func.func @transform_3(%arg0: i32, %arg1: i32, %arg2: i32) -> (i32, i32) {
    %c0_i32 = arith.constant 0 : i32
    return %arg0, %arg1 : i32, i32
  }
}

</mosaic_0001>

<llo_original>
// kernel: tpu_custom_call.1
$region0: #{tpu_custom_call.1}
  #allocation0 [shape = 'u32[]', space=smem, size = 0x4, offset = 0x4, fixed_abs, tag = 'smem constant byte address 0x4 - core index']
  #allocation1 [shape = 'u32[144,128]{1,0:T(1,128)}', space=vmem, size = 0x12000, scoped, tag = 'internal scratch']
  #allocation2 [shape = 'f32[16,32]{1,0:T(8,128)}', space=vmem, size = 0x2000, scoped, tag = 'scratch operand']
  %s0 = inlined_call_operand.hbm [shape: bf16[16,32], index: 0, kind: input, shape index: {}]
  %s1 = inlined_call_operand.hbm [shape: bf16[32,32], index: 1, kind: input, shape index: {}]
  %s2 = inlined_call_operand.vmem [shape: f32[1,32], index: 2, kind: input, shape index: {}]
  %s3 = inlined_call_operand.hbm [shape: bf16[16,32], index: 3, kind: output, shape index: {}]
  %s4 = sld [smem:[#allocation0]]
  $region38: #{tpu_custom_call.1} parent=0
    _
  %s6 = ssub.s32 1, %s4
  %s7 = scalar_select 0, %s6, %s4
  $region1: #{tpu_custom_call.1} parent=0
    #allocation3 [shape = 'u8[4096]{0}', space=vmem, size = 0x1000, scoped, tag = 'input window, operand 0, single buffered']
    #allocation4 [shape = 's32[1]{0}', space=sflag, size = 0x4, scoped, tag = 'scoped memory for tpu_custom_call.1']
    #allocation5 [shape = 's32[1]{0}', space=sflag, size = 0x4, scoped, tag = 'scoped memory for tpu_custom_call.1']
    #allocation6 [shape = 'u8[8192]{0}', space=vmem, size = 0x2000, scoped, tag = 'input window, operand 1, single buffered']
    #allocation7 [shape = 's32[1]{0}', space=sflag, size = 0x4, scoped, tag = 'scoped memory for tpu_custom_call.1']
    #allocation8 [shape = 'u8[4096]{0}', space=vmem, size = 0x1000, scoped, tag = 'output window, operand 0, single buffered']
    %8 = vsyncpa [#allocation4], 0
    %9 = vsyncpa [#allocation7], 0
    %10 = vsyncpa [#allocation5], 0
    // Predicated region
    $region2: #{tpu_custom_call.1} parent=1 // pred_check
      _
    $region3: #{tpu_custom_call.1} parent=1 // pred_check_branch
      %12 = sbr.rel (0) target = $region5
    $region4: #{tpu_custom_call.1} parent=1 // pred_region
      %s14 = ssub.s32 128, 128
      %15 = vsyncadd [#allocation4], %s14
      %s16 = sshll.u32 [#allocation3], 4
      %s17 = int_to_ptr.vmem [resolvable:$true] %s16
      %22 = dma.hbm_to_vmem [thread:$0]  %s0, 128, %s17, [#allocation4], 64, 64, 4
    $region5: #{tpu_custom_call.1} parent=1 // pred_fallthru
      _
    // Predicated region
    $region6: #{tpu_custom_call.1} parent=1 // pred_check
      _
    $region7: #{tpu_custom_call.1} parent=1 // pred_check_branch
      %24 = sbr.rel (0) target = $region9
    $region8: #{tpu_custom_call.1} parent=1 // pred_region
      %s26 = ssub.s32 256, 256
      %27 = vsyncadd [#allocation7], %s26
      %s28 = sshll.u32 [#allocation6], 4
      %s29 = int_to_ptr.vmem [resolvable:$true] %s28
      %34 = dma.hbm_to_vmem [thread:$0]  %s1, 256, %s29, [#allocation7], 64, 64, 4
    $region9: #{tpu_custom_call.1} parent=1 // pred_fallthru
      _
    // Predicated region
    $region10: #{tpu_custom_call.1} parent=1 // pred_check
      _
    $region11: #{tpu_custom_call.1} parent=1 // pred_check_branch
      %36 = sbr.rel (0) target = $region13
    $region12: #{tpu_custom_call.1} parent=1 // pred_region
      _
    $region13: #{tpu_custom_call.1} parent=1 // pred_fallthru
      _
    // Predicated region
    $region14: #{tpu_custom_call.1} parent=1 // pred_check
      _
    $region15: #{tpu_custom_call.1} parent=1 // pred_check_branch
      %38 = sbr.rel (0) target = $region17
    $region16: #{tpu_custom_call.1} parent=1 // pred_region
      %39 = dma.done [#allocation4], 128
    $region17: #{tpu_custom_call.1} parent=1 // pred_fallthru
      _
    // Predicated region
    $region18: #{tpu_custom_call.1} parent=1 // pred_check
      _
    $region19: #{tpu_custom_call.1} parent=1 // pred_check_branch
      %41 = sbr.rel (0) target = $region21
    $region20: #{tpu_custom_call.1} parent=1 // pred_region
      %42 = dma.done [#allocation7], 256
    $region21: #{tpu_custom_call.1} parent=1 // pred_fallthru
      _
    %p44 = scmp.eq.s32.totalorder 0, 0
    // Predicated region
    $region22: #{tpu_custom_call.1} parent=1 // pred_check
      %p45 = pneg %p44
    $region23: #{tpu_custom_call.1} parent=1 // pred_check_branch
      %47 = sbr.rel (%p45) target = $region25
    $region24: #{tpu_custom_call.1} parent=1 // pred_region
      %vm48 = vcmask 261120
      %49 = vst.msk [vmem:[#allocation2] sm:$0xff] %vm48, 0.0
      %50 = vst.msk [vmem:[#allocation2 + $0x8] sm:$0xff] %vm48, 0.0
    $region25: #{tpu_custom_call.1} parent=1 // pred_fallthru
      _
    %v51 = vld [vmem:[#allocation2] sm:$0xff]
    %v52 = vld [vmem:[#allocation2 + $0x8] sm:$0xff]
    %v53 = vld [vmem:[#allocation3] sm:$0xf]
    %v54 = vld [vmem:[#allocation3 + $0x4] sm:$0xf]
    %v55 = vld [vmem:[#allocation6] sm:$0xf]
    %v56 = vld [vmem:[#allocation6 + $0x4] sm:$0xf]
    %v57 = vld [vmem:[#allocation6 + $0x8] sm:$0xf]
    %v58 = vld [vmem:[#allocation6 + $0xc] sm:$0xf]
    %v61 = vunpack.c.l.b16 %v53
    %v62 = vunpack.c.l.b16 %v54
    %v63 = vpack.c.b16 %v62, %v61
    %v68 = vunpack.c.l.b16 %v55
    %v69 = vunpack.c.l.b16 %v56
    %v70 = vunpack.c.l.b16 %v57
    %v71 = vunpack.c.l.b16 %v58
    %v72 = vpack.c.b16 %v69, %v68
    %v73 = vpack.c.b16 %v71, %v70
    %vm76 = vcmask 261120
    %v78 = vsel %vm76, %v63, 0
    %80 = vmatprep.subr.bf16.mxu0 0
    %81 = vmatpush1.bf16.msra.mxu0 %v72
    %82 = vmatprep.subr.bf16.mxu0 0
    %83 = vmatpush1.bf16.msra.mxu0 %v73
    %84 = vmatprep.subr.bf16.mxu0 0
    %85 = vmatpush1.bf16.msra.mxu0 0
    %86 = vmatprep.subr.bf16.mxu0 0
    %87 = vmatpush1.bf16.msra.mxu0 0
    %88 = vmatprep.subr.bf16.mxu0 0
    %89 = vmatpush1.bf16.msra.mxu0 0
    %90 = vmatprep.subr.bf16.mxu0 0
    %91 = vmatpush1.bf16.msra.mxu0 0
    %92 = vmatprep.subr.bf16.mxu0 0
    %93 = vmatpush1.bf16.msra.mxu0 0
    %94 = vmatprep.subr.bf16.mxu0 0
    %95 = vmatpush1.bf16.msra.mxu0 0
    %96 = vmatprep.subr.bf16.mxu0 0
    %97 = vmatpush1.bf16.msra.mxu0 0
    %98 = vmatprep.subr.bf16.mxu0 0
    %99 = vmatpush1.bf16.msra.mxu0 0
    %100 = vmatprep.subr.bf16.mxu0 0
    %101 = vmatpush1.bf16.msra.mxu0 0
    %102 = vmatprep.subr.bf16.mxu0 0
    %103 = vmatpush1.bf16.msra.mxu0 0
    %104 = vmatprep.subr.bf16.mxu0 0
    %105 = vmatpush1.bf16.msra.mxu0 0
    %106 = vmatprep.subr.bf16.mxu0 0
    %107 = vmatpush1.bf16.msra.mxu0 0
    %108 = vmatprep.subr.bf16.mxu0 0
    %109 = vmatpush1.bf16.msra.mxu0 0
    %110 = vmatprep.subr.bf16.mxu0 0
    %111 = vmatpush1.bf16.msra.mxu0 0
    %112 = vmatprep.mubr.bf16.mxu0 0
    %113 = vmatmul.mubr.bf16.gmra.mrb[0].mxu0 %v78
    %v114 = vpop.f32.mrb[0].mxu0
    %v115 = vadd.f32 0.0, %v114
    %v116 = vpop.f32.mrb[0].mxu0
    %v117 = vpop.f32.mrb[0].mxu0
    %v118 = vadd.f32 0.0, %v117
    %v119 = vpop.f32.mrb[0].mxu0
    %120 = vdwg.mxu0
    %v121 = vadd.f32 %v51, %v115
    %v122 = vadd.f32 %v52, %v118
    %123 = vst.msk [vmem:[#allocation2] sm:$0xff] %vm76, %v121
    %124 = vst.msk [vmem:[#allocation2 + $0x8] sm:$0xff] %vm76, %v122
    // Predicated region
    $region26: #{tpu_custom_call.1} parent=1 // pred_check
      %p125 = pneg %p44
    $region27: #{tpu_custom_call.1} parent=1 // pred_check_branch
      %127 = sbr.rel (%p125) target = $region29
    $region28: #{tpu_custom_call.1} parent=1 // pred_region
      %v128 = vld [vmem:[#allocation2] sm:$0xff]
      %v129 = vld [vmem:[#allocation2 + $0x8] sm:$0xff]
      %v130 = vld [vmem:[%s2] sm:$0x1]
      %v132 = vlaneseq
      %v133 = vshrl.u32 %v132, 7
      %v134 = vsub.s32 0, %v133
      %v135 = vrot.slane %v130, %v134
      %v137 = vadd.f32 %v128, %v135
      %v138 = vadd.f32 %v129, %v135
      %v139 = vpack.c.bf16 %v138, %v137
      %v141 = vunpack.c.l.b16 %v139
      %v142 = vunpack.c.h.b16 %v139
      %v143 = vpack.c.b16 %v141, %v141
      %v144 = vpack.c.b16 %v142, %v142
      %vm147 = vcmask 257024
      %148 = vst.msk [vmem:[#allocation8] sm:$0xf] %vm147, %v143
      %149 = vst.msk [vmem:[#allocation8 + $0x4] sm:$0xf] %vm147, %v144
    $region29: #{tpu_custom_call.1} parent=1 // pred_fallthru
      _
    // Predicated region
    $region30: #{tpu_custom_call.1} parent=1 // pred_check
      _
    $region31: #{tpu_custom_call.1} parent=1 // pred_check_branch
      %151 = sbr.rel (0) target = $region33
    $region32: #{tpu_custom_call.1} parent=1 // pred_region
      %s153 = ssub.s32 128, 128
      %154 = vsyncadd [#allocation5], %s153
      %s155 = sshll.u32 [#allocation8], 4
      %s156 = int_to_ptr.vmem [resolvable:$true] %s155
      %161 = dma.vmem_to_hbm [thread:$0]  %s156, 128, %s3, [#allocation5], 64, 64, 4
    $region33: #{tpu_custom_call.1} parent=1 // pred_fallthru
      _
    // Predicated region
    $region34: #{tpu_custom_call.1} parent=1 // pred_check
      _
    $region35: #{tpu_custom_call.1} parent=1 // pred_check_branch
      %163 = sbr.rel (0) target = $region37
    $region36: #{tpu_custom_call.1} parent=1 // pred_region
      %164 = dma.done [#allocation5], 128
    $region37: #{tpu_custom_call.1} parent=1 // pred_fallthru
      _
    %165 = vsyncpa [#allocation4], 1
    %166 = vsyncpa [#allocation7], 1
    %167 = vsyncpa [#allocation5], 1

</llo_original>
